<compile_context>
chip_gen: v6e
topology: v6e:2x2x1
jax: 0.10.0
libtpu: 0.0.40
codegen_flags: <defaults>
</compile_context>

<pallas_src>
import functools

import jax
import jax.numpy as jnp
from jax.experimental import pallas as pl
from jax.experimental.pallas import tpu as pltpu


def _round_up(a, b):
    return (a + b - 1) // b * b


# ---------------------------------------------------------------------------
# Pass 1: per-domain sums / sums-of-squares.
# Grid = (F tiles [parallel], N tiles [arbitrary]); the (D, TF) outputs stay
# VMEM-resident across the N axis (accumulator pattern, init at n == 0).
# ---------------------------------------------------------------------------
def _stats_kernel(y_ref, x_ref, sums_ref, sumsq_ref, *, d_pad):
    @pl.when(pl.program_id(1) == 0)
    def _():
        sums_ref[...] = jnp.zeros_like(sums_ref)
        sumsq_ref[...] = jnp.zeros_like(sumsq_ref)

    x = x_ref[...]                                            # (TN, TF) f32
    y = y_ref[...]                                            # (TN, 1)  i32
    dom = jax.lax.broadcasted_iota(jnp.int32, (y.shape[0], d_pad), 1)
    onehot = (y == dom).astype(jnp.float32)                   # (TN, D) 0/1
    # rows with out-of-range labels (incl. padded rows) -> all-zero one-hot row

    # Contract the row axis of both operands: one MXU pass per statistic.
    # f32 operands take Mosaic's multi-pass f32 MXU path (exact enough for the
    # 1e-5 tolerance; one-hot entries are exactly representable).
    dn = (((0,), (0,)), ((), ()))
    sums_ref[...] += jax.lax.dot_general(
        onehot, x, dn, preferred_element_type=jnp.float32)
    sumsq_ref[...] += jax.lax.dot_general(
        onehot, x * x, dn, preferred_element_type=jnp.float32)


# ---------------------------------------------------------------------------
# Pass 2: per-row normalization, tiled over (features, batch), both parallel.
# out = x * scale[y] + shift[y]; the per-row gather is a one-hot MXU matmul.
# ---------------------------------------------------------------------------
def _apply_kernel(y_ref, x_ref, scale_ref, shift_ref, out_ref, *, d_pad):
    x = x_ref[...]                                            # (TN, TF) f32
    y = y_ref[...]                                            # (TN, 1)  i32
    dom = jax.lax.broadcasted_iota(jnp.int32, (y.shape[0], d_pad), 1)
    onehot = (y == dom).astype(jnp.float32)                   # (TN, D)

    # Staged epilogue: only one (TN, TF) gathered temp live at a time.
    out_ref[...] = x * jnp.dot(onehot, scale_ref[...],
                               preferred_element_type=jnp.float32)
    out_ref[...] += jnp.dot(onehot, shift_ref[...],
                            preferred_element_type=jnp.float32)


def _pick_tiles(n_rows, f_pad, d_pad):
    """Lane-dense feature tile + VMEM-budgeted batch tile (independent of N)."""
    tf = 128
    for cand in (512, 256):
        if f_pad % cand == 0:
            tf = cand
            break
    # v7x megacore: prefer >= 2 feature-grid steps so both TensorCores work.
    if f_pad // tf < 2 and tf > 128:
        tf //= 2

    # Per-step working set ~ 30 B per (row, feature) element (double-buffered
    # x + out blocks, x*x / one-hot / gathered-scale temps) + resident
    # (D, TF) scale & shift blocks.  Budget well under the explicit 48 MiB
    # vmem_limit_bytes (and v7x's 64 MiB physical VMEM per TC).
    budget = 20 * 1024 * 1024
    tn = (budget - 16 * d_pad * tf) // (30 * tf)
    tn = max(8, (tn // 8) * 8)
    tn = min(tn, 2048)
    tn = min(tn, _round_up(n_rows, 8))   # never bigger than the (padded) batch
    return tn, tf


def ds_batch_norm(x, y, gamma, beta, *, eps=1e-5):
    """x: (N, F) f32, y: (N,) int, gamma/beta: (n_domain, F) f32 -> (N, F) f32."""
    # TODO(synk): the PyTorch module also updates each BatchNorm1d's running
    # stats (momentum) as a training-time side effect; only the forward output
    # is computed here.
    N, F = x.shape
    n_domain = gamma.shape[0]

    x = x.astype(jnp.float32)
    y_i = y.astype(jnp.int32)
    gamma = gamma.astype(jnp.float32)
    beta = beta.astype(jnp.float32)

    # ---- layout plumbing ----------------------------------------------------
    d_pad = max(8, _round_up(n_domain, 8))     # sublane-aligned domain axis
    f_pad = _round_up(F, 128)                  # lane-dense feature axis
    tn, tf = _pick_tiles(N, f_pad, d_pad)
    n_pad = _round_up(N, tn)

    if f_pad != F:
        x = jnp.pad(x, ((0, 0), (0, f_pad - F)))
        gamma = jnp.pad(gamma, ((0, 0), (0, f_pad - F)))
        beta = jnp.pad(beta, ((0, 0), (0, f_pad - F)))
    if d_pad != n_domain:
        gamma = jnp.pad(gamma, ((0, d_pad - n_domain), (0, 0)))
        beta = jnp.pad(beta, ((0, d_pad - n_domain), (0, 0)))
    if n_pad != N:
        x = jnp.pad(x, ((0, n_pad - N), (0, 0)))
        # Padded rows get an out-of-range label -> zero one-hot row -> no
        # contribution to stats, zero output (sliced off at the end).
        y_i = jnp.pad(y_i, (0, n_pad - N), constant_values=d_pad)
    y_col = y_i.reshape(n_pad, 1)

    f_tiles = f_pad // tf
    n_tiles = n_pad // tn
    vmem_limit = 48 * 1024 * 1024   # safe on v5e/v6e (128 MiB) and v7x (64 MiB)

    # ---- pass 1: per-domain sums / sums-of-squares ---------------------------
    sums, sumsq = pl.pallas_call(
        functools.partial(_stats_kernel, d_pad=d_pad),
        out_shape=(jax.ShapeDtypeStruct((d_pad, f_pad), jnp.float32),
                   jax.ShapeDtypeStruct((d_pad, f_pad), jnp.float32)),
        grid_spec=pltpu.PrefetchScalarGridSpec(
            num_scalar_prefetch=0,
            grid=(f_tiles, n_tiles),
            in_specs=[
                pl.BlockSpec((tn, 1), lambda f, n: (n, 0)),      # label tile
                pl.BlockSpec((tn, tf), lambda f, n: (n, f)),     # x tile
            ],
            out_specs=[
                pl.BlockSpec((d_pad, tf), lambda f, n: (0, f)),  # sums (resident)
                pl.BlockSpec((d_pad, tf), lambda f, n: (0, f)),  # sumsq (resident)
            ],
        ),
        compiler_params=pltpu.CompilerParams(
            dimension_semantics=("parallel", "arbitrary"),
            vmem_limit_bytes=vmem_limit),
    )(y_col, x)

    # ---- tiny (D, F) finalization: fold BN into per-domain scale / shift ----
    valid = jnp.logical_and(y_i >= 0, y_i < n_domain)
    y_clip = jnp.clip(y_i, 0, d_pad - 1)
    counts = jnp.zeros((d_pad,), jnp.float32).at[y_clip].add(
        valid.astype(jnp.float32))
    cnt = counts[:, None]                                     # (D, 1)
    safe_cnt = jnp.maximum(cnt, 1.0)
    mean = sums / safe_cnt                                    # (D, F_pad)
    var = jnp.maximum(sumsq / safe_cnt - mean * mean, 0.0)    # biased variance
    inv_std = jax.lax.rsqrt(var + eps)
    bn_scale = gamma * inv_std
    is_multi = cnt > 1.5
    is_single = jnp.logical_and(cnt > 0.5, cnt < 1.5)
    # count>1 -> BN affine; count==1 -> identity; count==0 (incl. padded
    # domains and out-of-range labels) -> zeros.
    scale_d = jnp.where(is_multi, bn_scale,
                        jnp.where(is_single, 1.0, 0.0))       # (D, F_pad)
    shift_d = jnp.where(is_multi, beta - mean * bn_scale, 0.0)

    # ---- pass 2: per-row apply ------------------------------------------------
    out = pl.pallas_call(
        functools.partial(_apply_kernel, d_pad=d_pad),
        out_shape=jax.ShapeDtypeStruct((n_pad, f_pad), jnp.float32),
        grid_spec=pltpu.PrefetchScalarGridSpec(
            num_scalar_prefetch=0,
            grid=(f_tiles, n_tiles),
            in_specs=[
                pl.BlockSpec((tn, 1), lambda f, n: (n, 0)),      # label tile
                pl.BlockSpec((tn, tf), lambda f, n: (n, f)),     # x tile
                pl.BlockSpec((d_pad, tf), lambda f, n: (0, f)),  # scale tile
                pl.BlockSpec((d_pad, tf), lambda f, n: (0, f)),  # shift tile
            ],
            out_specs=pl.BlockSpec((tn, tf), lambda f, n: (n, f)),
        ),
        compiler_params=pltpu.CompilerParams(
            dimension_semantics=("parallel", "parallel"),
            vmem_limit_bytes=vmem_limit),
    )(y_col, x, scale_d, shift_d)

    if n_pad != N or f_pad != F:
        out = out[:N, :F]
    return out


def _reference(x, y, gamma, beta, eps=1e-5):
    """Pure-numpy reference mirroring the PyTorch forward (training-mode BN)."""
    import numpy as np
    x_np = np.asarray(x)
    y_np = np.asarray(y)
    out = np.zeros_like(x_np, dtype=np.float32)
    n_domain = gamma.shape[0]
    for i in range(n_domain):
        idx = np.where(y_np == i)[0]
        if len(idx) > 1:
            xs = x_np[idx]
            mean = xs.mean(axis=0)
            var = xs.var(axis=0)  # biased
            out[idx] = (xs - mean) / np.sqrt(var + eps) * np.asarray(gamma[i]) \
                       + np.asarray(beta[i])
        elif len(idx) == 1:
            out[idx] = x_np[idx]
    return out


if __name__ == "__main__":
    import numpy as np

    N, F, n_domain = 8, 32, 3
    eps = 1e-5

    key = jax.random.PRNGKey(0)
    kx, kg, kb = jax.random.split(key, 3)
    # Slightly non-zero mean to exercise the variance path.
    x = 0.5 + jax.random.normal(kx, (N, F), dtype=jnp.float32)
    # Domains: domain 0 has 0 rows, domain 1 has exactly 1 row, domain 2 the rest.
    y = jnp.array([2, 2, 2, 2, 2, 2, 1, 2], dtype=jnp.int32)

    gamma = 1.0 + 0.1 * jax.random.normal(kg, (n_domain, F), dtype=jnp.float32)
    beta = 0.1 * jax.random.normal(kb, (n_domain, F), dtype=jnp.float32)

    out = ds_batch_norm(x, y, gamma, beta, eps=eps)
    out = jax.block_until_ready(out)

    ref = _reference(x, y, gamma, beta, eps=eps)
    np.testing.assert_allclose(np.asarray(out), ref, rtol=1e-5, atol=1e-5)

    print("KERNEL_OK")
</pallas_src>

<mosaic_0001>
module attributes {stable_mosaic.version = 11 : i64} {
  func.func @_stats_kernel(%arg0: i32, %arg1: i32, %arg2: memref<8x1xi32, #tpu.memory_space<vmem>>, %arg3: memref<8x128xf32, #tpu.memory_space<vmem>>, %arg4: memref<8x128xf32, #tpu.memory_space<vmem>>, %arg5: memref<8x128xf32, #tpu.memory_space<vmem>>) attributes {dimension_semantics = [#tpu.dimension_semantics<parallel>, #tpu.dimension_semantics<arbitrary>], iteration_bounds = array<i64: 1, 1>, scalar_prefetch = 0 : i64, scratch_operands = 0 : i64, tpu.core_type = #tpu.core_type<tc>, window_params = [{transform_indices = @transform_0, window_bounds = array<i64: 8, 1>}, {transform_indices = @transform_1, window_bounds = array<i64: 8, 128>}, {transform_indices = @transform_2, window_bounds = array<i64: 8, 128>}, {transform_indices = @transform_3, window_bounds = array<i64: 8, 128>}]} {
    %c0_i32 = arith.constant 0 : i32
    %0 = arith.cmpi eq, %arg1, %c0_i32 : i32
    %1 = arith.extui %0 : i1 to i32
    %c0_i32_0 = arith.constant 0 : i32
    %2 = arith.cmpi ne, %1, %c0_i32_0 : i32
    scf.if %2 {
      %cst_13 = arith.constant 0.000000e+00 : f32
      %19 = vector.broadcast %cst_13 : f32 to vector<8x128xf32>
      %c0_14 = arith.constant 0 : index
      %c0_15 = arith.constant 0 : index
      %20 = vector.load %arg4[%c0_14, %c0_15] : memref<8x128xf32, #tpu.memory_space<vmem>>, vector<8x128xf32>
      tpu.vector_store %arg4[%c0_14, %c0_15], %19 {strides = array<i32>} : memref<8x128xf32, #tpu.memory_space<vmem>>, vector<8x128xf32>,
      %cst_16 = arith.constant 0.000000e+00 : f32
      %21 = vector.broadcast %cst_16 : f32 to vector<8x128xf32>
      %c0_17 = arith.constant 0 : index
      %c0_18 = arith.constant 0 : index
      %22 = vector.load %arg5[%c0_17, %c0_18] : memref<8x128xf32, #tpu.memory_space<vmem>>, vector<8x128xf32>
      tpu.vector_store %arg5[%c0_17, %c0_18], %21 {strides = array<i32>} : memref<8x128xf32, #tpu.memory_space<vmem>>, vector<8x128xf32>,
    } else {
    }
    %c0 = arith.constant 0 : index
    %c0_1 = arith.constant 0 : index
    %3 = vector.load %arg3[%c0, %c0_1] : memref<8x128xf32, #tpu.memory_space<vmem>>, vector<8x128xf32>
    %c0_2 = arith.constant 0 : index
    %c0_3 = arith.constant 0 : index
    %4 = vector.load %arg2[%c0_2, %c0_3] : memref<8x1xi32, #tpu.memory_space<vmem>>, vector<8x1xi32>
    %5 = tpu.iota {dimensions = array<i32: 1>} : vector<8x8xi32>
    %6 = vector.broadcast %4 : vector<8x1xi32> to vector<8x8xi32>
    %7 = arith.cmpi eq, %6, %5 : vector<8x8xi32>
    %8 = arith.extui %7 : vector<8x8xi1> to vector<8x8xi32>
    %9 = arith.sitofp %8 : vector<8x8xi32> to vector<8x8xf32>
    %c0_4 = arith.constant 0 : index
    %c0_5 = arith.constant 0 : index
    %10 = vector.load %arg4[%c0_4, %c0_5] : memref<8x128xf32, #tpu.memory_space<vmem>>, vector<8x128xf32>
    %cst = arith.constant dense<0.000000e+00> : vector<8x128xf32>
    %11 = tpu.matmul %9, %3, %cst {dimension_numbers = #tpu.dot_dimension_numbers<[0], [0], [1], [1], [0, 1, 1, 1], [], []>} : vector<8x8xf32>, vector<8x128xf32>, vector<8x128xf32> -> vector<8x128xf32>
    %12 = arith.addf %10, %11 : vector<8x128xf32>
    %c0_6 = arith.constant 0 : index
    %c0_7 = arith.constant 0 : index
    %13 = vector.load %arg4[%c0_6, %c0_7] : memref<8x128xf32, #tpu.memory_space<vmem>>, vector<8x128xf32>
    tpu.vector_store %arg4[%c0_6, %c0_7], %12 {strides = array<i32>} : memref<8x128xf32, #tpu.memory_space<vmem>>, vector<8x128xf32>,
    %c0_8 = arith.constant 0 : index
    %c0_9 = arith.constant 0 : index
    %14 = vector.load %arg5[%c0_8, %c0_9] : memref<8x128xf32, #tpu.memory_space<vmem>>, vector<8x128xf32>
    %15 = arith.mulf %3, %3 : vector<8x128xf32>
    %cst_10 = arith.constant dense<0.000000e+00> : vector<8x128xf32>
    %16 = tpu.matmul %9, %15, %cst_10 {dimension_numbers = #tpu.dot_dimension_numbers<[0], [0], [1], [1], [0, 1, 1, 1], [], []>} : vector<8x8xf32>, vector<8x128xf32>, vector<8x128xf32> -> vector<8x128xf32>
    %17 = arith.addf %14, %16 : vector<8x128xf32>
    %c0_11 = arith.constant 0 : index
    %c0_12 = arith.constant 0 : index
    %18 = vector.load %arg5[%c0_11, %c0_12] : memref<8x128xf32, #tpu.memory_space<vmem>>, vector<8x128xf32>
    tpu.vector_store %arg5[%c0_11, %c0_12], %17 {strides = array<i32>} : memref<8x128xf32, #tpu.memory_space<vmem>>, vector<8x128xf32>,
    return
  }
  func.func @transform_0(%arg0: i32, %arg1: i32) -> (i32, i32) {
    %c0_i32 = arith.constant 0 : i32
    %c0_i32_0 = arith.constant 0 : i32
    return %arg1, %c0_i32 : i32, i32
  }
  func.func @transform_1(%arg0: i32, %arg1: i32) -> (i32, i32) {
    %c0_i32 = arith.constant 0 : i32
    return %arg1, %arg0 : i32, i32
  }
  func.func @transform_2(%arg0: i32, %arg1: i32) -> (i32, i32) {
    %c0_i32 = arith.constant 0 : i32
    %c0_i32_0 = arith.constant 0 : i32
    return %c0_i32, %arg0 : i32, i32
  }
  func.func @transform_3(%arg0: i32, %arg1: i32) -> (i32, i32) {
    %c0_i32 = arith.constant 0 : i32
    %c0_i32_0 = arith.constant 0 : i32
    return %c0_i32, %arg0 : i32, i32
  }
}

</mosaic_0001>

<llo_original>
// kernel: tpu_custom_call.1
$region0: #{tpu_custom_call.1}
  #allocation0 [shape = 'u32[]', space=smem, size = 0x4, offset = 0x4, fixed_abs, tag = 'smem constant byte address 0x4 - core index']
  #allocation1 [shape = 'u32[144,128]{1,0:T(1,128)}', space=vmem, size = 0x12000, scoped, tag = 'internal scratch']
  %s0 = inlined_call_operand.vmem [shape: s32[8,1], index: 0, kind: input, shape index: {}]
  %s1 = inlined_call_operand.vmem [shape: f32[8,128], index: 1, kind: input, shape index: {}]
  %s2 = inlined_call_operand.hbm [shape: f32[8,128], index: 2, kind: output, shape index: {0}]
  %s3 = inlined_call_operand.hbm [shape: f32[8,128], index: 3, kind: output, shape index: {1}]
  %4 = xla_tuple %s2, %s3
  %s5 = sld [smem:[#allocation0]]
  $region30: #{tpu_custom_call.1} parent=0
    _
  %s7 = ssub.s32 1, %s5
  %s8 = scalar_select 0, %s7, %s5
  $region1: #{tpu_custom_call.1} parent=0
    #allocation2 [shape = 'u8[4096]{0}', space=vmem, size = 0x1000, scoped, tag = 'output window, operand 0, single buffered']
    #allocation3 [shape = 's32[1]{0}', space=sflag, size = 0x4, scoped, tag = 'scoped memory for tpu_custom_call.1']
    #allocation4 [shape = 'u8[4096]{0}', space=vmem, size = 0x1000, scoped, tag = 'output window, operand 1, single buffered']
    #allocation5 [shape = 's32[1]{0}', space=sflag, size = 0x4, scoped, tag = 'scoped memory for tpu_custom_call.1']
    %9 = vsyncpa [#allocation3], 0
    %10 = vsyncpa [#allocation5], 0
    // Predicated region
    $region2: #{tpu_custom_call.1} parent=1 // pred_check
      _
    $region3: #{tpu_custom_call.1} parent=1 // pred_check_branch
      %12 = sbr.rel (0) target = $region5
    $region4: #{tpu_custom_call.1} parent=1 // pred_region
      _
    $region5: #{tpu_custom_call.1} parent=1 // pred_fallthru
      _
    // Predicated region
    $region6: #{tpu_custom_call.1} parent=1 // pred_check
      _
    $region7: #{tpu_custom_call.1} parent=1 // pred_check_branch
      %14 = sbr.rel (0) target = $region9
    $region8: #{tpu_custom_call.1} parent=1 // pred_region
      _
    $region9: #{tpu_custom_call.1} parent=1 // pred_fallthru
      _
    %p15 = scmp.eq.s32.totalorder 0, 0
    // Predicated region
    $region10: #{tpu_custom_call.1} parent=1 // pred_check
      %p16 = pneg %p15
    $region11: #{tpu_custom_call.1} parent=1 // pred_check_branch
      %18 = sbr.rel (%p16) target = $region13
    $region12: #{tpu_custom_call.1} parent=1 // pred_region
      %19 = vst [vmem:[#allocation2] sm:$0xff] 0.0
      %20 = vst [vmem:[#allocation4] sm:$0xff] 0.0
    $region13: #{tpu_custom_call.1} parent=1 // pred_fallthru
      _
    %v21 = vld [vmem:[%s1] sm:$0xff]
    %v22 = vld [vmem:[%s0] sm:$0xff]
    %v23 = vlaneseq
    %v24 = vand.u32 %v23, 127
    %25 = vset.pattern.permute.xlu0 0
    %26 = vperm.xlu0 %25, %v22
    %v27 = vpop.permute.xlu0 %26
    %vm28 = vcmp.eq.s32.totalorder %v27, %v24
    %v29 = vsel %vm28, 1, 0
    %v30 = vcvt.s32.f32 %v29
    %v31 = vld [vmem:[#allocation2] sm:$0xff]
    %32 = vxpose.xlu0.b32.start [1/16] %v30, 128
    %33 = vxpose.xlu0.b32.cont [2/16] 0.0, 128
    %34 = vxpose.xlu0.b32.cont [3/16] 0.0, 128
    %35 = vxpose.xlu0.b32.cont [4/16] 0.0, 128
    %36 = vxpose.xlu0.b32.cont [5/16] 0.0, 128
    %37 = vxpose.xlu0.b32.cont [6/16] 0.0, 128
    %38 = vxpose.xlu0.b32.cont [7/16] 0.0, 128
    %39 = vxpose.xlu0.b32.cont [8/16] 0.0, 128
    %40 = vxpose.xlu0.b32.cont [9/16] 0.0, 128
    %41 = vxpose.xlu0.b32.cont [10/16] 0.0, 128
    %42 = vxpose.xlu0.b32.cont [11/16] 0.0, 128
    %43 = vxpose.xlu0.b32.cont [12/16] 0.0, 128
    %44 = vxpose.xlu0.b32.cont [13/16] 0.0, 128
    %45 = vxpose.xlu0.b32.cont [14/16] 0.0, 128
    %46 = vxpose.xlu0.b32.cont [15/16] 0.0, 128
    %47 = vxpose.xlu0.b32.end [16/16] 0.0, 128
    %v48 = vpop.trf.xlu0
    %v49 = vpop.trf.xlu0
    %v50 = vpop.trf.xlu0
    %v51 = vpop.trf.xlu0
    %v52 = vpop.trf.xlu0
    %v53 = vpop.trf.xlu0
    %v54 = vpop.trf.xlu0
    %v55 = vpop.trf.xlu0
    %v56 = vpop.trf.xlu0
    %v57 = vpop.trf.xlu0
    %v58 = vpop.trf.xlu0
    %v59 = vpop.trf.xlu0
    %v60 = vpop.trf.xlu0
    %v61 = vpop.trf.xlu0
    %v62 = vpop.trf.xlu0
    %v63 = vpop.trf.xlu0
    %vm64 = vcmask 64512
    %v66 = vsel %vm64, %v48, 0
    %68 = vmatprep.subr.mxu0 0.0
    %69 = vmatpush1.msra.mxu0 0.0
    %70 = vmatprep.subr.mxu0 0.0
    %71 = vmatpush1.msra.mxu0 0.0
    %72 = vmatprep.subr.mxu0 0.0
    %73 = vmatpush1.msra.mxu0 0.0
    %74 = vmatprep.subr.mxu0 0.0
    %75 = vmatpush1.msra.mxu0 0.0
    %76 = vmatprep.subr.mxu0 0.0
    %77 = vmatpush1.msra.mxu0 0.0
    %78 = vmatprep.subr.mxu0 0.0
    %79 = vmatpush1.msra.mxu0 0.0
    %80 = vmatprep.subr.mxu0 0.0
    %81 = vmatpush1.msra.mxu0 0.0
    %82 = vmatprep.subr.mxu0 0.0
    %83 = vmatpush1.msra.mxu0 0.0
    %84 = vmatprep.subr.mxu0 0.0
    %85 = vmatpush1.msra.mxu0 0.0
    %86 = vmatprep.subr.mxu0 0.0
    %87 = vmatpush1.msra.mxu0 0.0
    %88 = vmatprep.subr.mxu0 0.0
    %89 = vmatpush1.msra.mxu0 0.0
    %90 = vmatprep.subr.mxu0 0.0
    %91 = vmatpush1.msra.mxu0 0.0
    %92 = vmatprep.subr.mxu0 0.0
    %93 = vmatpush1.msra.mxu0 0.0
    %94 = vmatprep.subr.mxu0 0.0
    %95 = vmatpush1.msra.mxu0 0.0
    %96 = vmatprep.subr.mxu0 0.0
    %97 = vmatpush1.msra.mxu0 0.0
    %98 = vmatprep.subr.mxu0 0.0
    %99 = vmatpush1.msra.mxu0 %v21
    %100 = vmatprep.subr.mxu0 0.0
    %101 = vmatpush2.msra.mxu0 0.0
    %102 = vmatprep.subr.mxu0 0.0
    %103 = vmatpush2.msra.mxu0 0.0
    %104 = vmatprep.subr.mxu0 0.0
    %105 = vmatpush2.msra.mxu0 0.0
    %106 = vmatprep.subr.mxu0 0.0
    %107 = vmatpush2.msra.mxu0 0.0
    %108 = vmatprep.subr.mxu0 0.0
    %109 = vmatpush2.msra.mxu0 0.0
    %110 = vmatprep.subr.mxu0 0.0
    %111 = vmatpush2.msra.mxu0 0.0
    %112 = vmatprep.subr.mxu0 0.0
    %113 = vmatpush2.msra.mxu0 0.0
    %114 = vmatprep.subr.mxu0 0.0
    %115 = vmatpush2.msra.mxu0 0.0
    %116 = vmatprep.subr.mxu0 0.0
    %117 = vmatpush2.msra.mxu0 0.0
    %118 = vmatprep.subr.mxu0 0.0
    %119 = vmatpush2.msra.mxu0 0.0
    %120 = vmatprep.subr.mxu0 0.0
    %121 = vmatpush2.msra.mxu0 0.0
    %122 = vmatprep.subr.mxu0 0.0
    %123 = vmatpush2.msra.mxu0 0.0
    %124 = vmatprep.subr.mxu0 0.0
    %125 = vmatpush2.msra.mxu0 0.0
    %126 = vmatprep.subr.mxu0 0.0
    %127 = vmatpush2.msra.mxu0 0.0
    %128 = vmatprep.subr.mxu0 0.0
    %129 = vmatpush2.msra.mxu0 0.0
    %130 = vmatprep.subr.mxu0 0.0
    %131 = vmatpush2.msra.mxu0 0.0
    %132 = vmatprep.mubr.f32.mxu0 0.0
    %133 = vmatmul.mubr.f32.gmra.mxu0 %v66
    %v134 = vpop.f32.mrf.mxu0
    %v135 = vadd.f32 0.0, %v134
    %v136 = vpop.f32.mrf.mxu0
    %137 = vdwg.mxu0
    %v138 = vadd.f32 %v31, %v135
    %139 = vst [vmem:[#allocation2] sm:$0xff] %v138
    %v140 = vld [vmem:[#allocation4] sm:$0xff]
    %v141 = vmul.f32 %v21, %v21
    %142 = vmatprep.subr.mxu0 0.0
    %143 = vmatpush1.msra.mxu0 0.0
    %144 = vmatprep.subr.mxu0 0.0
    %145 = vmatpush1.msra.mxu0 0.0
    %146 = vmatprep.subr.mxu0 0.0
    %147 = vmatpush1.msra.mxu0 0.0
    %148 = vmatprep.subr.mxu0 0.0
    %149 = vmatpush1.msra.mxu0 0.0
    %150 = vmatprep.subr.mxu0 0.0
    %151 = vmatpush1.msra.mxu0 0.0
    %152 = vmatprep.subr.mxu0 0.0
    %153 = vmatpush1.msra.mxu0 0.0
    %154 = vmatprep.subr.mxu0 0.0
    %155 = vmatpush1.msra.mxu0 0.0
    %156 = vmatprep.subr.mxu0 0.0
    %157 = vmatpush1.msra.mxu0 0.0
    %158 = vmatprep.subr.mxu0 0.0
    %159 = vmatpush1.msra.mxu0 0.0
    %160 = vmatprep.subr.mxu0 0.0
    %161 = vmatpush1.msra.mxu0 0.0
    %162 = vmatprep.subr.mxu0 0.0
    %163 = vmatpush1.msra.mxu0 0.0
    %164 = vmatprep.subr.mxu0 0.0
    %165 = vmatpush1.msra.mxu0 0.0
    %166 = vmatprep.subr.mxu0 0.0
    %167 = vmatpush1.msra.mxu0 0.0
    %168 = vmatprep.subr.mxu0 0.0
    %169 = vmatpush1.msra.mxu0 0.0
    %170 = vmatprep.subr.mxu0 0.0
    %171 = vmatpush1.msra.mxu0 0.0
    %172 = vmatprep.subr.mxu0 0.0
    %173 = vmatpush1.msra.mxu0 %v141
    %174 = vmatprep.subr.mxu0 0.0
    %175 = vmatpush2.msra.mxu0 0.0
    %176 = vmatprep.subr.mxu0 0.0
    %177 = vmatpush2.msra.mxu0 0.0
    %178 = vmatprep.subr.mxu0 0.0
    %179 = vmatpush2.msra.mxu0 0.0
    %180 = vmatprep.subr.mxu0 0.0
    %181 = vmatpush2.msra.mxu0 0.0
    %182 = vmatprep.subr.mxu0 0.0
    %183 = vmatpush2.msra.mxu0 0.0
    %184 = vmatprep.subr.mxu0 0.0
    %185 = vmatpush2.msra.mxu0 0.0
    %186 = vmatprep.subr.mxu0 0.0
    %187 = vmatpush2.msra.mxu0 0.0
    %188 = vmatprep.subr.mxu0 0.0
    %189 = vmatpush2.msra.mxu0 0.0
    %190 = vmatprep.subr.mxu0 0.0
    %191 = vmatpush2.msra.mxu0 0.0
    %192 = vmatprep.subr.mxu0 0.0
    %193 = vmatpush2.msra.mxu0 0.0
    %194 = vmatprep.subr.mxu0 0.0
    %195 = vmatpush2.msra.mxu0 0.0
    %196 = vmatprep.subr.mxu0 0.0
    %197 = vmatpush2.msra.mxu0 0.0
    %198 = vmatprep.subr.mxu0 0.0
    %199 = vmatpush2.msra.mxu0 0.0
    %200 = vmatprep.subr.mxu0 0.0
    %201 = vmatpush2.msra.mxu0 0.0
    %202 = vmatprep.subr.mxu0 0.0
    %203 = vmatpush2.msra.mxu0 0.0
    %204 = vmatprep.subr.mxu0 0.0
    %205 = vmatpush2.msra.mxu0 0.0
    %206 = vmatprep.mubr.f32.mxu0 0.0
    %207 = vmatmul.mubr.f32.gmra.mxu0 %v66
    %v208 = vpop.f32.mrf.mxu0
    %v209 = vadd.f32 0.0, %v208
    %v210 = vpop.f32.mrf.mxu0
    %211 = vdwg.mxu0
    %v212 = vadd.f32 %v140, %v209
    %213 = vst [vmem:[#allocation4] sm:$0xff] %v212
    // Predicated region
    $region14: #{tpu_custom_call.1} parent=1 // pred_check
      _
    $region15: #{tpu_custom_call.1} parent=1 // pred_check_branch
      %215 = sbr.rel (0) target = $region17
    $region16: #{tpu_custom_call.1} parent=1 // pred_region
      %s217 = ssub.s32 128, 128
      %218 = vsyncadd [#allocation3], %s217
      %s220 = sshll.u32 [#allocation2], 4
      %s221 = int_to_ptr.vmem [resolvable:$true] %s220
      %223 = dma.vmem_to_hbm [thread:$0]  %s221, 128, %s2, [#allocation3]
    $region17: #{tpu_custom_call.1} parent=1 // pred_fallthru
      _
    // Predicated region
    $region18: #{tpu_custom_call.1} parent=1 // pred_check
      _
    $region19: #{tpu_custom_call.1} parent=1 // pred_check_branch
      %225 = sbr.rel (0) target = $region21
    $region20: #{tpu_custom_call.1} parent=1 // pred_region
      %s227 = ssub.s32 128, 128
      %228 = vsyncadd [#allocation5], %s227
      %s230 = sshll.u32 [#allocation4], 4
      %s231 = int_to_ptr.vmem [resolvable:$true] %s230
      %233 = dma.vmem_to_hbm [thread:$0]  %s231, 128, %s3, [#allocation5]
    $region21: #{tpu_custom_call.1} parent=1 // pred_fallthru
      _
    // Predicated region
    $region22: #{tpu_custom_call.1} parent=1 // pred_check
      _
    $region23: #{tpu_custom_call.1} parent=1 // pred_check_branch
      %235 = sbr.rel (0) target = $region25
    $region24: #{tpu_custom_call.1} parent=1 // pred_region
      %236 = dma.done [#allocation3], 128
    $region25: #{tpu_custom_call.1} parent=1 // pred_fallthru
      _
    // Predicated region
    $region26: #{tpu_custom_call.1} parent=1 // pred_check
      _
    $region27: #{tpu_custom_call.1} parent=1 // pred_check_branch
      %238 = sbr.rel (0) target = $region29
    $region28: #{tpu_custom_call.1} parent=1 // pred_region
      %239 = dma.done [#allocation5], 128
    $region29: #{tpu_custom_call.1} parent=1 // pred_fallthru
      _
    %240 = vsyncpa [#allocation3], 1
    %241 = vsyncpa [#allocation5], 1

</llo_original>
